<compile_context>
chip_gen: v7x
topology: tpu7x:2x2x1
jax: 0.10.0
libtpu: 0.0.40
codegen_flags: <defaults>
</compile_context>

<pallas_src>
import functools
import math

import jax
import jax.numpy as jnp
from jax.experimental import pallas as pl
from jax.experimental.pallas import tpu as pltpu


def _round_up(x, m):
    return ((x + m - 1) // m) * m


def _attention_kernel(q_ref, kt_ref, v_ref, *refs, scale, emit_weights):
    # q_ref: (B, tq, D); kt_ref: (B, D, tk); v_ref: (B, tk, Dv_p)
    if emit_weights:
        o_ref, w_ref, acc_ref = refs
    else:
        o_ref, acc_ref = refs
        w_ref = None

    j = pl.program_id(1)

    @pl.when(j == 0)
    def _init():
        acc_ref[...] = jnp.zeros_like(acc_ref)

    # scores[b] = (q[b] @ k[b]^T) / sqrt(d)  -> (B, tq, tk), f32 MXU accumulate.
    # K is already transposed, so the contraction is MXU-native (no XLU work).
    scores = jnp.einsum("bqd,bdk->bqk", q_ref[...], kt_ref[...],
                        preferred_element_type=jnp.float32) * scale

    # softmax over dim=0 (the BATCH axis), exactly like F.softmax(scores, dim=0).
    # The reduction is per (q, k) element, so each k tile is self-contained.
    m = jnp.max(scores, axis=0, keepdims=True)
    e = jnp.exp(scores - m)
    # Exact reciprocal: weights are a user-visible output; denom is tiny.
    w = e * pl.reciprocal(jnp.sum(e, axis=0, keepdims=True), approx=False)

    if emit_weights:
        w_ref[...] = w.astype(w_ref.dtype)

    v = v_ref[...]
    acc_ref[...] += jnp.einsum("bqk,bkd->bqd", w.astype(v.dtype), v,
                               preferred_element_type=jnp.float32)

    @pl.when(j == pl.num_programs(1) - 1)
    def _store():
        o_ref[...] = acc_ref[...].astype(o_ref.dtype)


def dot_product_attention(queries, keys, values, *, return_weights=True,
                          max_q_tile=256, max_k_tile=512):
    """Scaled dot-product attention with softmax over dim=0 (batch), matching
    the PyTorch module.  Returns (output, attention_weights) if
    return_weights=True, else just output.  Dropout is identity (eval / p=0)."""
    B, Lq, D = queries.shape
    Bk, Lk, Dk = keys.shape
    Bv, Lv, Dv = values.shape
    assert B == Bk == Bv and D == Dk and Lk == Lv

    in_dtype = queries.dtype
    in_bytes = jnp.dtype(in_dtype).itemsize
    w_dtype = in_dtype                       # softmax keeps the input dtype
    w_bytes = jnp.dtype(w_dtype).itemsize
    sub = max(8, 32 // in_bytes)             # sublane packing: 8 f32 / 16 bf16 / 32 i8

    # ---- generation-aware VMEM budget (~75% of physical, headroom for
    #      compiler-internal scratch): ~96 MiB v5e/v6e, ~48 MiB v7x.
    try:
        vmem_cap = int(pltpu.get_tpu_info().vmem_capacity_bytes)
    except Exception:
        vmem_cap = 64 << 20                  # conservative fallback (v7x-safe)
    budget = (vmem_cap * 3) // 4

    Dv_p = _round_up(Dv, 128)                # lane-dense output block

    def step_bytes(tq, tk):
        q_b = 2 * B * tq * D * in_bytes              # double-buffered q tile
        k_b = 2 * B * D * tk * in_bytes              # double-buffered k^T tile
        v_b = 2 * B * tk * Dv_p * in_bytes           # double-buffered v tile
        o_b = 2 * B * tq * Dv_p * in_bytes           # output tile
        w_b = (2 * B * tq * tk * w_bytes) if return_weights else 0
        acc = B * tq * Dv_p * 4                      # f32 accumulator scratch
        soft = 2 * B * tq * tk * 4                   # live f32 scores / weights
        return q_b + k_b + v_b + o_b + w_b + acc + soft

    # ---- q tile: balanced split, >= 2 tiles whenever Lq allows so both v7x
    #      TensorCores get work and DMA/compute pipelining exists.
    if Lq <= sub:
        tq = _round_up(Lq, sub)
    else:
        n_q = max(2, pl.cdiv(Lq, max_q_tile))
        tq = _round_up(pl.cdiv(Lq, n_q), sub)

    # ---- k tile: lane-dense (multiple of 128), balanced against max_k_tile.
    Lk_128 = _round_up(Lk, 128)
    n_k = max(1, pl.cdiv(Lk_128, _round_up(max_k_tile, 128)))
    tk = _round_up(pl.cdiv(Lk_128, n_k), 128)

    # ---- fit the VMEM budget: shrink tk first (keeps the MXU M dim = tq),
    #      only then shrink tq.
    while step_bytes(tq, tk) > budget and tk > 128:
        tk = max(128, _round_up(tk // 2, 128))
    while step_bytes(tq, tk) > budget and tq > sub:
        tq = max(sub, _round_up(tq // 2, sub))

    Lq_p = _round_up(Lq, tq)
    Lk_p = _round_up(Lk, tk)
    num_q_tiles = Lq_p // tq
    num_k_tiles = Lk_p // tk

    # ---- one-time HBM relayout / padding in the wrapper.
    # Zero-padded K columns give zero scores; the softmax is per-(q,k) element
    # over the batch axis so real columns are untouched; zero-padded V rows
    # contribute nothing to the output; padded regions are sliced off.
    keys_t = jnp.transpose(keys, (0, 2, 1))               # (B, D, Lk)
    if Lk_p != Lk:
        keys_t = jnp.pad(keys_t, ((0, 0), (0, 0), (0, Lk_p - Lk)))
    if Lk_p != Lk or Dv_p != Dv:
        values = jnp.pad(values, ((0, 0), (0, Lk_p - Lk), (0, Dv_p - Dv)))
    if Lq_p != Lq:
        queries = jnp.pad(queries, ((0, 0), (0, Lq_p - Lq), (0, 0)))

    vmem_limit = int(min(vmem_cap, max(budget, step_bytes(tq, tk) * 5 // 4)))

    cost = pl.CostEstimate(
        flops=2 * B * Lq_p * Lk_p * (D + Dv_p),
        transcendentals=B * Lq_p * Lk_p,
        bytes_accessed=((B * Lq_p * D + B * Lq_p * Dv_p) * in_bytes
                        + (B * Lk_p * D + B * Lk_p * Dv_p) * in_bytes * num_q_tiles
                        + (B * Lq_p * Lk_p * w_bytes if return_weights else 0)),
    )

    kernel = functools.partial(_attention_kernel,
                               scale=1.0 / math.sqrt(D),
                               emit_weights=return_weights)

    out_shapes = [jax.ShapeDtypeStruct((B, Lq_p, Dv_p), in_dtype)]
    out_specs = [pl.BlockSpec((B, tq, Dv_p), lambda i, j: (0, i, 0))]
    if return_weights:
        out_shapes.append(jax.ShapeDtypeStruct((B, Lq_p, Lk_p), w_dtype))
        out_specs.append(pl.BlockSpec((B, tq, tk), lambda i, j: (0, i, j)))

    results = pl.pallas_call(
        kernel,
        out_shape=tuple(out_shapes),
        grid_spec=pltpu.PrefetchScalarGridSpec(
            num_scalar_prefetch=0,
            grid=(num_q_tiles, num_k_tiles),
            in_specs=[
                pl.BlockSpec((B, tq, D), lambda i, j: (0, i, 0)),
                pl.BlockSpec((B, D, tk), lambda i, j: (0, 0, j)),
                pl.BlockSpec((B, tk, Dv_p), lambda i, j: (0, j, 0)),
            ],
            out_specs=tuple(out_specs),
            scratch_shapes=[pltpu.VMEM((B, tq, Dv_p), jnp.float32)],
        ),
        compiler_params=pltpu.CompilerParams(
            dimension_semantics=("parallel", "arbitrary"),
            vmem_limit_bytes=vmem_limit,
        ),
        cost_estimate=cost,
    )(queries, keys_t, values)

    out = results[0][:, :Lq, :Dv]
    if return_weights:
        return out, results[1][:, :Lq, :Lk]
    return out


def _reference(queries, keys, values):
    d = queries.shape[-1]
    scores = jnp.einsum("bqd,bkd->bqk", queries, keys) / math.sqrt(d)
    w = jax.nn.softmax(scores, axis=0)   # dim=0 (batch), as in the PyTorch module
    return jnp.einsum("bqk,bkd->bqd", w, values), w


if __name__ == "__main__":
    key = jax.random.PRNGKey(0)
    kq, kk, kv = jax.random.split(key, 3)

    B, Lq, Lk, D, Dv = 2, 8, 8, 32, 32
    queries = jax.random.normal(kq, (B, Lq, D), dtype=jnp.float32)
    keys = jax.random.normal(kk, (B, Lk, D), dtype=jnp.float32)
    values = jax.random.normal(kv, (B, Lk, Dv), dtype=jnp.float32)

    out, weights = dot_product_attention(queries, keys, values)
    out = jax.block_until_ready(out)
    weights = jax.block_until_ready(weights)

    ref_out, ref_w = _reference(queries, keys, values)
    assert jnp.allclose(out, ref_out, atol=1e-5, rtol=1e-5)
    assert jnp.allclose(weights, ref_w, atol=1e-5, rtol=1e-5)

    # output-only path (skips the (B, Lq, Lk) attention-weight writeback)
    out_only = jax.block_until_ready(
        dot_product_attention(queries, keys, values, return_weights=False))
    assert jnp.allclose(out_only, ref_out, atol=1e-5, rtol=1e-5)

    print("KERNEL_OK")
</pallas_src>

<mosaic_0001>
module attributes {stable_mosaic.version = 11 : i64} {
  func.func @_attention_kernel(%arg0: i32, %arg1: i32, %arg2: memref<2x8x32xf32, #tpu.memory_space<vmem>>, %arg3: memref<2x32x128xf32, #tpu.memory_space<vmem>>, %arg4: memref<2x128x128xf32, #tpu.memory_space<vmem>>, %arg5: memref<2x8x128xf32, #tpu.memory_space<vmem>>, %arg6: memref<2x8x128xf32, #tpu.memory_space<vmem>>, %arg7: memref<2x8x128xf32, #tpu.memory_space<vmem>>) attributes {dimension_semantics = [#tpu.dimension_semantics<parallel>, #tpu.dimension_semantics<arbitrary>], iteration_bounds = array<i64: 1, 1>, scalar_prefetch = 0 : i64, scratch_operands = 1 : i64, tpu.core_type = #tpu.core_type<tc>, window_params = [{transform_indices = @transform_0, window_bounds = array<i64: 2, 8, 32>}, {transform_indices = @transform_1, window_bounds = array<i64: 2, 32, 128>}, {transform_indices = @transform_2, window_bounds = array<i64: 2, 128, 128>}, {transform_indices = @transform_3, window_bounds = array<i64: 2, 8, 128>}, {transform_indices = @transform_4, window_bounds = array<i64: 2, 8, 128>}]} {
    %c0_i32 = arith.constant 0 : i32
    %0 = arith.cmpi eq, %arg1, %c0_i32 : i32
    %1 = arith.extui %0 : i1 to i32
    %c0_i32_0 = arith.constant 0 : i32
    %2 = arith.cmpi ne, %1, %c0_i32_0 : i32
    scf.if %2 {
      %cst_24 = arith.constant 0.000000e+00 : f32
      %27 = vector.broadcast %cst_24 : f32 to vector<2x8x128xf32>
      %c0_25 = arith.constant 0 : index
      %c0_26 = arith.constant 0 : index
      %c0_27 = arith.constant 0 : index
      %28 = vector.load %arg7[%c0_25, %c0_26, %c0_27] : memref<2x8x128xf32, #tpu.memory_space<vmem>>, vector<2x8x128xf32>
      tpu.vector_store %arg7[%c0_25, %c0_26, %c0_27], %27 {strides = array<i32>} : memref<2x8x128xf32, #tpu.memory_space<vmem>>, vector<2x8x128xf32>,
    } else {
    }
    %c0 = arith.constant 0 : index
    %c0_1 = arith.constant 0 : index
    %c0_2 = arith.constant 0 : index
    %3 = vector.load %arg2[%c0, %c0_1, %c0_2] : memref<2x8x32xf32, #tpu.memory_space<vmem>>, vector<2x8x32xf32>
    %c0_3 = arith.constant 0 : index
    %c0_4 = arith.constant 0 : index
    %c0_5 = arith.constant 0 : index
    %4 = vector.load %arg3[%c0_3, %c0_4, %c0_5] : memref<2x32x128xf32, #tpu.memory_space<vmem>>, vector<2x32x128xf32>
    "tpu.trace_start"() <{level = 10 : i32, message = "bqd,bdk->bqk"}> : () -> ()
    %cst = arith.constant dense<0.000000e+00> : vector<2x8x128xf32>
    %5 = tpu.matmul %3, %4, %cst {dimension_numbers = #tpu.dot_dimension_numbers<[2], [1], [1], [2], [0, 0, 0, 1, 1, 2], [0], [0]>} : vector<2x8x32xf32>, vector<2x32x128xf32>, vector<2x8x128xf32> -> vector<2x8x128xf32>
    "tpu.trace_stop"() : () -> ()
    %cst_6 = arith.constant 0.176776692 : f32
    %6 = vector.broadcast %cst_6 : f32 to vector<2x8x128xf32>
    %7 = arith.mulf %5, %6 : vector<2x8x128xf32>
    %cst_7 = arith.constant dense<0xFF800000> : vector<8x128xf32>
    %8 = vector.multi_reduction <maximumf>, %7, %cst_7 [0] : vector<2x8x128xf32> to vector<8x128xf32>
    %9 = vector.shape_cast %8 : vector<8x128xf32> to vector<1x8x128xf32>
    %10 = vector.broadcast %9 : vector<1x8x128xf32> to vector<2x8x128xf32>
    %11 = arith.subf %7, %10 : vector<2x8x128xf32>
    %12 = math.exp %11 : vector<2x8x128xf32>
    %cst_8 = arith.constant dense<0.000000e+00> : vector<8x128xf32>
    %13 = vector.multi_reduction <add>, %12, %cst_8 [0] : vector<2x8x128xf32> to vector<8x128xf32>
    %14 = vector.shape_cast %13 : vector<8x128xf32> to vector<1x8x128xf32>
    %15 = tpu.reciprocal %14 : vector<1x8x128xf32> -> vector<1x8x128xf32>
    %16 = vector.broadcast %15 : vector<1x8x128xf32> to vector<2x8x128xf32>
    %17 = arith.mulf %12, %16 : vector<2x8x128xf32>
    %c0_9 = arith.constant 0 : index
    %c0_10 = arith.constant 0 : index
    %c0_11 = arith.constant 0 : index
    %18 = vector.load %arg6[%c0_9, %c0_10, %c0_11] : memref<2x8x128xf32, #tpu.memory_space<vmem>>, vector<2x8x128xf32>
    tpu.vector_store %arg6[%c0_9, %c0_10, %c0_11], %17 {strides = array<i32>} : memref<2x8x128xf32, #tpu.memory_space<vmem>>, vector<2x8x128xf32>,
    %c0_12 = arith.constant 0 : index
    %c0_13 = arith.constant 0 : index
    %c0_14 = arith.constant 0 : index
    %19 = vector.load %arg4[%c0_12, %c0_13, %c0_14] : memref<2x128x128xf32, #tpu.memory_space<vmem>>, vector<2x128x128xf32>
    %c0_15 = arith.constant 0 : index
    %c0_16 = arith.constant 0 : index
    %c0_17 = arith.constant 0 : index
    %20 = vector.load %arg7[%c0_15, %c0_16, %c0_17] : memref<2x8x128xf32, #tpu.memory_space<vmem>>, vector<2x8x128xf32>
    "tpu.trace_start"() <{level = 10 : i32, message = "bqk,bkd->bqd"}> : () -> ()
    %cst_18 = arith.constant dense<0.000000e+00> : vector<2x8x128xf32>
    %21 = tpu.matmul %17, %19, %cst_18 {dimension_numbers = #tpu.dot_dimension_numbers<[2], [1], [1], [2], [0, 0, 0, 1, 1, 2], [0], [0]>} : vector<2x8x128xf32>, vector<2x128x128xf32>, vector<2x8x128xf32> -> vector<2x8x128xf32>
    "tpu.trace_stop"() : () -> ()
    %22 = arith.addf %20, %21 : vector<2x8x128xf32>
    %c0_19 = arith.constant 0 : index
    %c0_20 = arith.constant 0 : index
    %c0_21 = arith.constant 0 : index
    %23 = vector.load %arg7[%c0_19, %c0_20, %c0_21] : memref<2x8x128xf32, #tpu.memory_space<vmem>>, vector<2x8x128xf32>
    tpu.vector_store %arg7[%c0_19, %c0_20, %c0_21], %22 {strides = array<i32>} : memref<2x8x128xf32, #tpu.memory_space<vmem>>, vector<2x8x128xf32>,
    %c0_i32_22 = arith.constant 0 : i32
    %24 = arith.cmpi eq, %arg1, %c0_i32_22 : i32
    %25 = arith.extui %24 : i1 to i32
    %c0_i32_23 = arith.constant 0 : i32
    %26 = arith.cmpi ne, %25, %c0_i32_23 : i32
    scf.if %26 {
      %c0_24 = arith.constant 0 : index
      %c0_25 = arith.constant 0 : index
      %c0_26 = arith.constant 0 : index
      %27 = vector.load %arg7[%c0_24, %c0_25, %c0_26] : memref<2x8x128xf32, #tpu.memory_space<vmem>>, vector<2x8x128xf32>
      %c0_27 = arith.constant 0 : index
      %c0_28 = arith.constant 0 : index
      %c0_29 = arith.constant 0 : index
      %28 = vector.load %arg5[%c0_27, %c0_28, %c0_29] : memref<2x8x128xf32, #tpu.memory_space<vmem>>, vector<2x8x128xf32>
      tpu.vector_store %arg5[%c0_27, %c0_28, %c0_29], %27 {strides = array<i32>} : memref<2x8x128xf32, #tpu.memory_space<vmem>>, vector<2x8x128xf32>,
    } else {
    }
    return
  }
  func.func @transform_0(%arg0: i32, %arg1: i32) -> (i32, i32, i32) {
    %c0_i32 = arith.constant 0 : i32
    %c0_i32_0 = arith.constant 0 : i32
    %c0_i32_1 = arith.constant 0 : i32
    return %c0_i32, %arg0, %c0_i32_0 : i32, i32, i32
  }
  func.func @transform_1(%arg0: i32, %arg1: i32) -> (i32, i32, i32) {
    %c0_i32 = arith.constant 0 : i32
    %c0_i32_0 = arith.constant 0 : i32
    %c0_i32_1 = arith.constant 0 : i32
    return %c0_i32, %c0_i32_0, %arg1 : i32, i32, i32
  }
  func.func @transform_2(%arg0: i32, %arg1: i32) -> (i32, i32, i32) {
    %c0_i32 = arith.constant 0 : i32
    %c0_i32_0 = arith.constant 0 : i32
    %c0_i32_1 = arith.constant 0 : i32
    return %c0_i32, %arg1, %c0_i32_0 : i32, i32, i32
  }
  func.func @transform_3(%arg0: i32, %arg1: i32) -> (i32, i32, i32) {
    %c0_i32 = arith.constant 0 : i32
    %c0_i32_0 = arith.constant 0 : i32
    %c0_i32_1 = arith.constant 0 : i32
    return %c0_i32, %arg0, %c0_i32_0 : i32, i32, i32
  }
  func.func @transform_4(%arg0: i32, %arg1: i32) -> (i32, i32, i32) {
    %c0_i32 = arith.constant 0 : i32
    %c0_i32_0 = arith.constant 0 : i32
    return %c0_i32, %arg0, %arg1 : i32, i32, i32
  }
}

</mosaic_0001>

<llo_original>
// kernel: tpu_custom_call.1
$region0: #{tpu_custom_call.1}
  #allocation0 [shape = 'u32[]', space=smem, size = 0x4, offset = 0x4, fixed_abs, tag = 'smem constant byte address 0x4 - core index']
  #allocation1 [shape = 'u32[144,128]{1,0:T(1,128)}', space=vmem, size = 0x12000, scoped, tag = 'internal scratch']
  #allocation2 [shape = 'f32[2,8,128]{2,1,0:T(8,128)}', space=vmem, size = 0x2000, scoped, tag = 'scratch operand']
  %s0 = inlined_call_operand.hbm [shape: f32[2,8,32], index: 0, kind: input, shape index: {}]
  %s1 = inlined_call_operand.hbm [shape: f32[2,32,128], index: 1, kind: input, shape index: {}]
  %s2 = inlined_call_operand.hbm [shape: f32[2,128,128], index: 2, kind: input, shape index: {}]
  %s3 = inlined_call_operand.hbm [shape: f32[2,8,128], index: 3, kind: output, shape index: {0}]
  %s4 = inlined_call_operand.hbm [shape: f32[2,8,128], index: 4, kind: output, shape index: {1}]
  %5 = xla_tuple %s3, %s4
  %s6 = sld [smem:[#allocation0]]
  $region50: #{tpu_custom_call.1} parent=0
    _
  %s8 = ssub.s32 1, %s6
  %s9 = scalar_select 0, %s8, %s6
  $region1: #{tpu_custom_call.1} parent=0
    #allocation3 [shape = 'u8[8192]{0}', space=vmem, size = 0x2000, scoped, tag = 'input window, operand 0, single buffered']
    #allocation4 [shape = 's32[1]{0}', space=sflag, size = 0x4, scoped, tag = 'scoped memory for tpu_custom_call.1']
    #allocation5 [shape = 's32[1]{0}', space=sflag, size = 0x4, scoped, tag = 'scoped memory for tpu_custom_call.1']
    #allocation6 [shape = 'u8[32768]{0}', space=vmem, size = 0x8000, scoped, tag = 'input window, operand 1, single buffered']
    #allocation7 [shape = 's32[1]{0}', space=sflag, size = 0x4, scoped, tag = 'scoped memory for tpu_custom_call.1']
    #allocation8 [shape = 'u8[131072]{0}', space=vmem, size = 0x20000, scoped, tag = 'input window, operand 2, single buffered']
    #allocation9 [shape = 'u8[8192]{0}', space=vmem, size = 0x2000, scoped, tag = 'output window, operand 0, single buffered']
    #allocation10 [shape = 'u8[8192]{0}', space=vmem, size = 0x2000, scoped, tag = 'output window, operand 1, single buffered']
    #allocation11 [shape = 's32[1]{0}', space=sflag, size = 0x4, scoped, tag = 'scoped memory for tpu_custom_call.1']
    %10 = vsyncpa [#allocation4], 0
    %11 = vsyncpa [#allocation7], 0
    %12 = vsyncpa [#allocation5], 0
    %13 = vsyncpa [#allocation11], 0
    // Predicated region
    $region2: #{tpu_custom_call.1} parent=1 // pred_check
      _
    $region3: #{tpu_custom_call.1} parent=1 // pred_check_branch
      %15 = sbr.rel (0) target = $region5
    $region4: #{tpu_custom_call.1} parent=1 // pred_region
      %s17 = ssub.s32 256, 256
      %18 = vsyncadd [#allocation4], %s17
      %s19 = sshll.u32 [#allocation3], 4
      %s20 = int_to_ptr.vmem [resolvable:$true] %s19
      %25 = dma.hbm_to_vmem [thread:$0]  %s0, 256, %s20, [#allocation4], 128, 128, 8
    $region5: #{tpu_custom_call.1} parent=1 // pred_fallthru
      _
    // Predicated region
    $region6: #{tpu_custom_call.1} parent=1 // pred_check
      _
    $region7: #{tpu_custom_call.1} parent=1 // pred_check_branch
      %27 = sbr.rel (0) target = $region9
    $region8: #{tpu_custom_call.1} parent=1 // pred_region
      %s29 = ssub.s32 1024, 1024
      %30 = vsyncadd [#allocation7], %s29
      %s31 = sshll.u32 [#allocation6], 4
      %s32 = int_to_ptr.vmem [resolvable:$true] %s31
      %37 = dma.hbm_to_vmem [thread:$0]  %s1, 1024, %s32, [#allocation7], 128, 128, 8
    $region9: #{tpu_custom_call.1} parent=1 // pred_fallthru
      _
    // Predicated region
    $region10: #{tpu_custom_call.1} parent=1 // pred_check
      _
    $region11: #{tpu_custom_call.1} parent=1 // pred_check_branch
      %39 = sbr.rel (0) target = $region13
    $region12: #{tpu_custom_call.1} parent=1 // pred_region
      %s41 = ssub.s32 4096, 4096
      %42 = vsyncadd [#allocation7], %s41
      %s43 = sshll.u32 [#allocation8], 4
      %s44 = int_to_ptr.vmem [resolvable:$true] %s43
      %49 = dma.hbm_to_vmem [thread:$0]  %s2, 4096, %s44, [#allocation7], 128, 128, 8
    $region13: #{tpu_custom_call.1} parent=1 // pred_fallthru
      _
    // Predicated region
    $region14: #{tpu_custom_call.1} parent=1 // pred_check
      _
    $region15: #{tpu_custom_call.1} parent=1 // pred_check_branch
      %51 = sbr.rel (0) target = $region17
    $region16: #{tpu_custom_call.1} parent=1 // pred_region
      %52 = dma.done [#allocation4], 256
    $region17: #{tpu_custom_call.1} parent=1 // pred_fallthru
      _
    // Predicated region
    $region18: #{tpu_custom_call.1} parent=1 // pred_check
      _
    $region19: #{tpu_custom_call.1} parent=1 // pred_check_branch
      %54 = sbr.rel (0) target = $region21
    $region20: #{tpu_custom_call.1} parent=1 // pred_region
      %55 = dma.done [#allocation7], 1024
    $region21: #{tpu_custom_call.1} parent=1 // pred_fallthru
      _
    // Predicated region
    $region22: #{tpu_custom_call.1} parent=1 // pred_check
      _
    $region23: #{tpu_custom_call.1} parent=1 // pred_check_branch
      %57 = sbr.rel (0) target = $region25
    $region24: #{tpu_custom_call.1} parent=1 // pred_region
      %58 = dma.done [#allocation7], 4096
    $region25: #{tpu_custom_call.1} parent=1 // pred_fallthru
      _
    %p59 = scmp.eq.s32.totalorder 0, 0
    // Predicated region
    $region26: #{tpu_custom_call.1} parent=1 // pred_check
      %p60 = pneg %p59
    $region27: #{tpu_custom_call.1} parent=1 // pred_check_branch
      %62 = sbr.rel (%p60) target = $region29
    $region28: #{tpu_custom_call.1} parent=1 // pred_region
      %63 = vst [vmem:[#allocation2] sm:$0xff] 0.0
      %64 = vst [vmem:[#allocation2 + $0x8] sm:$0xff] 0.0
    $region29: #{tpu_custom_call.1} parent=1 // pred_fallthru
      _
    %v65 = vld [vmem:[#allocation3] sm:$0xff]
    %v66 = vld [vmem:[#allocation3 + $0x8] sm:$0xff]
    %v67 = vld [vmem:[#allocation6] sm:$0xff]
    %v68 = vld [vmem:[#allocation6 + $0x8] sm:$0xff]
    %v69 = vld [vmem:[#allocation6 + $0x10] sm:$0xff]
    %v70 = vld [vmem:[#allocation6 + $0x18] sm:$0xff]
    %v71 = vld [vmem:[#allocation6 + $0x20] sm:$0xff]
    %v72 = vld [vmem:[#allocation6 + $0x28] sm:$0xff]
    %v73 = vld [vmem:[#allocation6 + $0x30] sm:$0xff]
    %v74 = vld [vmem:[#allocation6 + $0x38] sm:$0xff]
    %vm75 = vcmask 261120
    %v77 = vsel %vm75, %v65, 0
    %79 = vmatprep.subr.mxu0 0.0
    %80 = vmatpush1.msra.mxu0 %v67
    %81 = vmatprep.subr.mxu0 0.0
    %82 = vmatpush1.msra.mxu0 %v68
    %83 = vmatprep.subr.mxu0 0.0
    %84 = vmatpush1.msra.mxu0 %v69
    %85 = vmatprep.subr.mxu0 0.0
    %86 = vmatpush1.msra.mxu0 %v70
    %87 = vmatprep.subr.mxu0 0.0
    %88 = vmatpush1.msra.mxu0 0.0
    %89 = vmatprep.subr.mxu0 0.0
    %90 = vmatpush1.msra.mxu0 0.0
    %91 = vmatprep.subr.mxu0 0.0
    %92 = vmatpush1.msra.mxu0 0.0
    %93 = vmatprep.subr.mxu0 0.0
    %94 = vmatpush1.msra.mxu0 0.0
    %95 = vmatprep.subr.mxu0 0.0
    %96 = vmatpush1.msra.mxu0 0.0
    %97 = vmatprep.subr.mxu0 0.0
    %98 = vmatpush1.msra.mxu0 0.0
    %99 = vmatprep.subr.mxu0 0.0
    %100 = vmatpush1.msra.mxu0 0.0
    %101 = vmatprep.subr.mxu0 0.0
    %102 = vmatpush1.msra.mxu0 0.0
    %103 = vmatprep.subr.mxu0 0.0
    %104 = vmatpush1.msra.mxu0 0.0
    %105 = vmatprep.subr.mxu0 0.0
    %106 = vmatpush1.msra.mxu0 0.0
    %107 = vmatprep.subr.mxu0 0.0
    %108 = vmatpush1.msra.mxu0 0.0
    %109 = vmatprep.subr.mxu0 0.0
    %110 = vmatpush1.msra.mxu0 0.0
    %111 = vmatprep.subr.mxu0 0.0
    %112 = vmatpush1.msra.mxu0 0.0
    %113 = vmatprep.subr.mxu0 0.0
    %114 = vmatpush1.msra.mxu0 0.0
    %115 = vmatprep.subr.mxu0 0.0
    %116 = vmatpush1.msra.mxu0 0.0
    %117 = vmatprep.subr.mxu0 0.0
    %118 = vmatpush1.msra.mxu0 0.0
    %119 = vmatprep.subr.mxu0 0.0
    %120 = vmatpush1.msra.mxu0 0.0
    %121 = vmatprep.subr.mxu0 0.0
    %122 = vmatpush1.msra.mxu0 0.0
    %123 = vmatprep.subr.mxu0 0.0
    %124 = vmatpush1.msra.mxu0 0.0
    %125 = vmatprep.subr.mxu0 0.0
    %126 = vmatpush1.msra.mxu0 0.0
    %127 = vmatprep.subr.mxu0 0.0
    %128 = vmatpush1.msra.mxu0 0.0
    %129 = vmatprep.subr.mxu0 0.0
    %130 = vmatpush1.msra.mxu0 0.0
    %131 = vmatprep.subr.mxu0 0.0
    %132 = vmatpush1.msra.mxu0 0.0
    %133 = vmatprep.subr.mxu0 0.0
    %134 = vmatpush1.msra.mxu0 0.0
    %135 = vmatprep.subr.mxu0 0.0
    %136 = vmatpush1.msra.mxu0 0.0
    %137 = vmatprep.subr.mxu0 0.0
    %138 = vmatpush1.msra.mxu0 0.0
    %139 = vmatprep.subr.mxu0 0.0
    %140 = vmatpush1.msra.mxu0 0.0
    %141 = vmatprep.subr.mxu0 0.0
    %142 = vmatpush1.msra.mxu0 0.0
    %143 = vmatprep.mubr.f32.mxu0 0.0
    %144 = vmatmul.mubr.f32.gmra.mrb[0].mxu0 %v77
    %v145 = vpop.f32.mrb[0].mxu0
    %v146 = vadd.f32 0.0, %v145
    %v147 = vpop.f32.mrb[0].mxu0
    %148 = vdwg.mxu0
    %v150 = vsel %vm75, %v66, 0
    %152 = vmatprep.subr.mxu0 0.0
    %153 = vmatpush1.msra.mxu0 %v71
    %154 = vmatprep.subr.mxu0 0.0
    %155 = vmatpush1.msra.mxu0 %v72
    %156 = vmatprep.subr.mxu0 0.0
    %157 = vmatpush1.msra.mxu0 %v73
    %158 = vmatprep.subr.mxu0 0.0
    %159 = vmatpush1.msra.mxu0 %v74
    %160 = vmatprep.subr.mxu0 0.0
    %161 = vmatpush1.msra.mxu0 0.0
    %162 = vmatprep.subr.mxu0 0.0
    %163 = vmatpush1.msra.mxu0 0.0
    %164 = vmatprep.subr.mxu0 0.0
    %165 = vmatpush1.msra.mxu0 0.0
    %166 = vmatprep.subr.mxu0 0.0
    %167 = vmatpush1.msra.mxu0 0.0
    %168 = vmatprep.subr.mxu0 0.0
    %169 = vmatpush1.msra.mxu0 0.0
    %170 = vmatprep.subr.mxu0 0.0
    %171 = vmatpush1.msra.mxu0 0.0
    %172 = vmatprep.subr.mxu0 0.0
    %173 = vmatpush1.msra.mxu0 0.0
    %174 = vmatprep.subr.mxu0 0.0
    %175 = vmatpush1.msra.mxu0 0.0
    %176 = vmatprep.subr.mxu0 0.0
    %177 = vmatpush1.msra.mxu0 0.0
    %178 = vmatprep.subr.mxu0 0.0
    %179 = vmatpush1.msra.mxu0 0.0
    %180 = vmatprep.subr.mxu0 0.0
    %181 = vmatpush1.msra.mxu0 0.0
    %182 = vmatprep.subr.mxu0 0.0
    %183 = vmatpush1.msra.mxu0 0.0
    %184 = vmatprep.subr.mxu0 0.0
    %185 = vmatpush1.msra.mxu0 0.0
    %186 = vmatprep.subr.mxu0 0.0
    %187 = vmatpush1.msra.mxu0 0.0
    %188 = vmatprep.subr.mxu0 0.0
    %189 = vmatpush1.msra.mxu0 0.0
    %190 = vmatprep.subr.mxu0 0.0
    %191 = vmatpush1.msra.mxu0 0.0
    %192 = vmatprep.subr.mxu0 0.0
    %193 = vmatpush1.msra.mxu0 0.0
    %194 = vmatprep.subr.mxu0 0.0
    %195 = vmatpush1.msra.mxu0 0.0
    %196 = vmatprep.subr.mxu0 0.0
    %197 = vmatpush1.msra.mxu0 0.0
    %198 = vmatprep.subr.mxu0 0.0
    %199 = vmatpush1.msra.mxu0 0.0
    %200 = vmatprep.subr.mxu0 0.0
    %201 = vmatpush1.msra.mxu0 0.0
    %202 = vmatprep.subr.mxu0 0.0
    %203 = vmatpush1.msra.mxu0 0.0
    %204 = vmatprep.subr.mxu0 0.0
    %205 = vmatpush1.msra.mxu0 0.0
    %206 = vmatprep.subr.mxu0 0.0
    %207 = vmatpush1.msra.mxu0 0.0
    %208 = vmatprep.subr.mxu0 0.0
    %209 = vmatpush1.msra.mxu0 0.0
    %210 = vmatprep.subr.mxu0 0.0
    %211 = vmatpush1.msra.mxu0 0.0
    %212 = vmatprep.subr.mxu0 0.0
    %213 = vmatpush1.msra.mxu0 0.0
    %214 = vmatprep.subr.mxu0 0.0
    %215 = vmatpush1.msra.mxu0 0.0
    %216 = vmatprep.mubr.f32.mxu0 0.0
    %217 = vmatmul.mubr.f32.gmra.mrb[0].mxu0 %v150
    %v218 = vpop.f32.mrb[0].mxu0
    %v219 = vadd.f32 0.0, %v218
    %v220 = vpop.f32.mrb[0].mxu0
    %221 = vdwg.mxu0
    %v222 = vmul.f32 %v146, 0.17677669
    %v223 = vmul.f32 %v219, 0.17677669
    %v224 = vmax.f32 %v222, %v223
    %v225 = vsub.f32 %v222, %v224
    %v226 = vsub.f32 %v223, %v224
    %v227 = vmul.f32 %v225, 1.442695
    %v228 = vpow.pop %v227
    %v229 = vmul.f32 %v226, 1.442695
    %v230 = vpow.pop %v229
    %v231 = vadd.f32 %v228, %v230
    %v232 = vrcp.pop %v231
    %v233 = vmul.f32 %v228, %v232
    %v234 = vmul.f32 %v230, %v232
    %235 = vst [vmem:[#allocation10] sm:$0xff] %v233
    %236 = vst [vmem:[#allocation10 + $0x8] sm:$0xff] %v234
    %v237 = vld [vmem:[#allocation8] sm:$0xff]
    %v238 = vld [vmem:[#allocation8 + $0x8] sm:$0xff]
    %v239 = vld [vmem:[#allocation8 + $0x10] sm:$0xff]
    %v240 = vld [vmem:[#allocation8 + $0x18] sm:$0xff]
    %v241 = vld [vmem:[#allocation8 + $0x20] sm:$0xff]
    %v242 = vld [vmem:[#allocation8 + $0x28] sm:$0xff]
    %v243 = vld [vmem:[#allocation8 + $0x30] sm:$0xff]
    %v244 = vld [vmem:[#allocation8 + $0x38] sm:$0xff]
    %v245 = vld [vmem:[#allocation8 + $0x40] sm:$0xff]
    %v246 = vld [vmem:[#allocation8 + $0x48] sm:$0xff]
    %v247 = vld [vmem:[#allocation8 + $0x50] sm:$0xff]
    %v248 = vld [vmem:[#allocation8 + $0x58] sm:$0xff]
    %v249 = vld [vmem:[#allocation8 + $0x60] sm:$0xff]
    %v250 = vld [vmem:[#allocation8 + $0x68] sm:$0xff]
    %v251 = vld [vmem:[#allocation8 + $0x70] sm:$0xff]
    %v252 = vld [vmem:[#allocation8 + $0x78] sm:$0xff]
    %v253 = vld [vmem:[#allocation8 + $0x80] sm:$0xff]
    %v254 = vld [vmem:[#allocation8 + $0x88] sm:$0xff]
    %v255 = vld [vmem:[#allocation8 + $0x90] sm:$0xff]
    %v256 = vld [vmem:[#allocation8 + $0x98] sm:$0xff]
    %v257 = vld [vmem:[#allocation8 + $0xa0] sm:$0xff]
    %v258 = vld [vmem:[#allocation8 + $0xa8] sm:$0xff]
    %v259 = vld [vmem:[#allocation8 + $0xb0] sm:$0xff]
    %v260 = vld [vmem:[#allocation8 + $0xb8] sm:$0xff]
    %v261 = vld [vmem:[#allocation8 + $0xc0] sm:$0xff]
    %v262 = vld [vmem:[#allocation8 + $0xc8] sm:$0xff]
    %v263 = vld [vmem:[#allocation8 + $0xd0] sm:$0xff]
    %v264 = vld [vmem:[#allocation8 + $0xd8] sm:$0xff]
    %v265 = vld [vmem:[#allocation8 + $0xe0] sm:$0xff]
    %v266 = vld [vmem:[#allocation8 + $0xe8] sm:$0xff]
    %v267 = vld [vmem:[#allocation8 + $0xf0] sm:$0xff]
    %v268 = vld [vmem:[#allocation8 + $0xf8] sm:$0xff]
    %v269 = vld [vmem:[#allocation2] sm:$0xff]
    %v270 = vld [vmem:[#allocation2 + $0x8] sm:$0xff]
    %271 = vmatprep.subr.mxu0 0.0
    %272 = vmatpush1.msra.mxu0 %v237
    %273 = vmatprep.subr.mxu0 0.0
    %274 = vmatpush1.msra.mxu0 %v238
    %275 = vmatprep.subr.mxu0 0.0
    %276 = vmatpush1.msra.mxu0 %v239
    %277 = vmatprep.subr.mxu0 0.0
    %278 = vmatpush1.msra.mxu0 %v240
    %279 = vmatprep.subr.mxu0 0.0
    %280 = vmatpush1.msra.mxu0 %v241
    %281 = vmatprep.subr.mxu0 0.0
    %282 = vmatpush1.msra.mxu0 %v242
    %283 = vmatprep.subr.mxu0 0.0
    %284 = vmatpush1.msra.mxu0 %v243
    %285 = vmatprep.subr.mxu0 0.0
    %286 = vmatpush1.msra.mxu0 %v244
    %287 = vmatprep.subr.mxu0 0.0
    %288 = vmatpush1.msra.mxu0 %v245
    %289 = vmatprep.subr.mxu0 0.0
    %290 = vmatpush1.msra.mxu0 %v246
    %291 = vmatprep.subr.mxu0 0.0
    %292 = vmatpush1.msra.mxu0 %v247
    %293 = vmatprep.subr.mxu0 0.0
    %294 = vmatpush1.msra.mxu0 %v248
    %295 = vmatprep.subr.mxu0 0.0
    %296 = vmatpush1.msra.mxu0 %v249
    %297 = vmatprep.subr.mxu0 0.0
    %298 = vmatpush1.msra.mxu0 %v250
    %299 = vmatprep.subr.mxu0 0.0
    %300 = vmatpush1.msra.mxu0 %v251
    %301 = vmatprep.subr.mxu0 0.0
    %302 = vmatpush1.msra.mxu0 %v252
    %303 = vmatprep.subr.mxu0 0.0
    %304 = vmatpush1.msra.mxu0 0.0
    %305 = vmatprep.subr.mxu0 0.0
    %306 = vmatpush1.msra.mxu0 0.0
    %307 = vmatprep.subr.mxu0 0.0
    %308 = vmatpush1.msra.mxu0 0.0
    %309 = vmatprep.subr.mxu0 0.0
    %310 = vmatpush1.msra.mxu0 0.0
    %311 = vmatprep.subr.mxu0 0.0
    %312 = vmatpush1.msra.mxu0 0.0
    %313 = vmatprep.subr.mxu0 0.0
    %314 = vmatpush1.msra.mxu0 0.0
    %315 = vmatprep.subr.mxu0 0.0
    %316 = vmatpush1.msra.mxu0 0.0
    %317 = vmatprep.subr.mxu0 0.0
    %318 = vmatpush1.msra.mxu0 0.0
    %319 = vmatprep.subr.mxu0 0.0
    %320 = vmatpush1.msra.mxu0 0.0
    %321 = vmatprep.subr.mxu0 0.0
    %322 = vmatpush1.msra.mxu0 0.0
    %323 = vmatprep.subr.mxu0 0.0
    %324 = vmatpush1.msra.mxu0 0.0
    %325 = vmatprep.subr.mxu0 0.0
    %326 = vmatpush1.msra.mxu0 0.0
    %327 = vmatprep.subr.mxu0 0.0
    %328 = vmatpush1.msra.mxu0 0.0
    %329 = vmatprep.subr.mxu0 0.0
    %330 = vmatpush1.msra.mxu0 0.0
    %331 = vmatprep.subr.mxu0 0.0
    %332 = vmatpush1.msra.mxu0 0.0
    %333 = vmatprep.subr.mxu0 0.0
    %334 = vmatpush1.msra.mxu0 0.0
    %335 = vmatprep.mubr.f32.mxu0 0.0
    %336 = vmatmul.mubr.f32.gmra.mrb[0].mxu0 %v233
    %v337 = vpop.f32.mrb[0].mxu0
    %v338 = vadd.f32 0.0, %v337
    %v339 = vpop.f32.mrb[0].mxu0
    %340 = vdwg.mxu0
    %341 = vmatprep.subr.mxu0 0.0
    %342 = vmatpush1.msra.mxu0 %v253
    %343 = vmatprep.subr.mxu0 0.0
    %344 = vmatpush1.msra.mxu0 %v254
    %345 = vmatprep.subr.mxu0 0.0
    %346 = vmatpush1.msra.mxu0 %v255
    %347 = vmatprep.subr.mxu0 0.0
    %348 = vmatpush1.msra.mxu0 %v256
    %349 = vmatprep.subr.mxu0 0.0
    %350 = vmatpush1.msra.mxu0 %v257
    %351 = vmatprep.subr.mxu0 0.0
    %352 = vmatpush1.msra.mxu0 %v258
    %353 = vmatprep.subr.mxu0 0.0
    %354 = vmatpush1.msra.mxu0 %v259
    %355 = vmatprep.subr.mxu0 0.0
    %356 = vmatpush1.msra.mxu0 %v260
    %357 = vmatprep.subr.mxu0 0.0
    %358 = vmatpush1.msra.mxu0 %v261
    %359 = vmatprep.subr.mxu0 0.0
    %360 = vmatpush1.msra.mxu0 %v262
    %361 = vmatprep.subr.mxu0 0.0
    %362 = vmatpush1.msra.mxu0 %v263
    %363 = vmatprep.subr.mxu0 0.0
    %364 = vmatpush1.msra.mxu0 %v264
    %365 = vmatprep.subr.mxu0 0.0
    %366 = vmatpush1.msra.mxu0 %v265
    %367 = vmatprep.subr.mxu0 0.0
    %368 = vmatpush1.msra.mxu0 %v266
    %369 = vmatprep.subr.mxu0 0.0
    %370 = vmatpush1.msra.mxu0 %v267
    %371 = vmatprep.subr.mxu0 0.0
    %372 = vmatpush1.msra.mxu0 %v268
    %373 = vmatprep.subr.mxu0 0.0
    %374 = vmatpush1.msra.mxu0 0.0
    %375 = vmatprep.subr.mxu0 0.0
    %376 = vmatpush1.msra.mxu0 0.0
    %377 = vmatprep.subr.mxu0 0.0
    %378 = vmatpush1.msra.mxu0 0.0
    %379 = vmatprep.subr.mxu0 0.0
    %380 = vmatpush1.msra.mxu0 0.0
    %381 = vmatprep.subr.mxu0 0.0
    %382 = vmatpush1.msra.mxu0 0.0
    %383 = vmatprep.subr.mxu0 0.0
    %384 = vmatpush1.msra.mxu0 0.0
    %385 = vmatprep.subr.mxu0 0.0
    %386 = vmatpush1.msra.mxu0 0.0
    %387 = vmatprep.subr.mxu0 0.0
    %388 = vmatpush1.msra.mxu0 0.0
    %389 = vmatprep.subr.mxu0 0.0
    %390 = vmatpush1.msra.mxu0 0.0
    %391 = vmatprep.subr.mxu0 0.0
    %392 = vmatpush1.msra.mxu0 0.0
    %393 = vmatprep.subr.mxu0 0.0
    %394 = vmatpush1.msra.mxu0 0.0
    %395 = vmatprep.subr.mxu0 0.0
    %396 = vmatpush1.msra.mxu0 0.0
    %397 = vmatprep.subr.mxu0 0.0
    %398 = vmatpush1.msra.mxu0 0.0
    %399 = vmatprep.subr.mxu0 0.0
    %400 = vmatpush1.msra.mxu0 0.0
    %401 = vmatprep.subr.mxu0 0.0
    %402 = vmatpush1.msra.mxu0 0.0
    %403 = vmatprep.subr.mxu0 0.0
    %404 = vmatpush1.msra.mxu0 0.0
    %405 = vmatprep.mubr.f32.mxu0 0.0
    %406 = vmatmul.mubr.f32.gmra.mrb[0].mxu0 %v234
    %v407 = vpop.f32.mrb[0].mxu0
    %v408 = vadd.f32 0.0, %v407
    %v409 = vpop.f32.mrb[0].mxu0
    %410 = vdwg.mxu0
    %v411 = vadd.f32 %v269, %v338
    %v412 = vadd.f32 %v270, %v408
    %413 = vst [vmem:[#allocation2] sm:$0xff] %v411
    %414 = vst [vmem:[#allocation2 + $0x8] sm:$0xff] %v412
    // Predicated region
    $region30: #{tpu_custom_call.1} parent=1 // pred_check
      %p415 = pneg %p59
    $region31: #{tpu_custom_call.1} parent=1 // pred_check_branch
      %417 = sbr.rel (%p415) target = $region33
    $region32: #{tpu_custom_call.1} parent=1 // pred_region
      %v418 = vld [vmem:[#allocation2] sm:$0xff]
      %v419 = vld [vmem:[#allocation2 + $0x8] sm:$0xff]
      %420 = vst [vmem:[#allocation9] sm:$0xff] %v418
      %421 = vst [vmem:[#allocation9 + $0x8] sm:$0xff] %v419
    $region33: #{tpu_custom_call.1} parent=1 // pred_fallthru
      _
    // Predicated region
    $region34: #{tpu_custom_call.1} parent=1 // pred_check
      _
    $region35: #{tpu_custom_call.1} parent=1 // pred_check_branch
      %423 = sbr.rel (0) target = $region37
    $region36: #{tpu_custom_call.1} parent=1 // pred_region
      %s425 = ssub.s32 256, 256
      %426 = vsyncadd [#allocation5], %s425
      %s427 = sshll.u32 [#allocation9], 4
      %s428 = int_to_ptr.vmem [resolvable:$true] %s427
      %433 = dma.vmem_to_hbm [thread:$0]  %s428, 256, %s3, [#allocation5], 128, 128, 8
    $region37: #{tpu_custom_call.1} parent=1 // pred_fallthru
      _
    // Predicated region
    $region38: #{tpu_custom_call.1} parent=1 // pred_check
      _
    $region39: #{tpu_custom_call.1} parent=1 // pred_check_branch
      %435 = sbr.rel (0) target = $region41
    $region40: #{tpu_custom_call.1} parent=1 // pred_region
      %s437 = ssub.s32 256, 256
      %438 = vsyncadd [#allocation11], %s437
      %s439 = sshll.u32 [#allocation10], 4
      %s440 = int_to_ptr.vmem [resolvable:$true] %s439
      %445 = dma.vmem_to_hbm [thread:$0]  %s440, 256, %s4, [#allocation11], 128, 128, 8
    $region41: #{tpu_custom_call.1} parent=1 // pred_fallthru
      _
    // Predicated region
    $region42: #{tpu_custom_call.1} parent=1 // pred_check
      _
    $region43: #{tpu_custom_call.1} parent=1 // pred_check_branch
      %447 = sbr.rel (0) target = $region45
    $region44: #{tpu_custom_call.1} parent=1 // pred_region
      %448 = dma.done [#allocation5], 256
    $region45: #{tpu_custom_call.1} parent=1 // pred_fallthru
      _
    // Predicated region
    $region46: #{tpu_custom_call.1} parent=1 // pred_check
      _
    $region47: #{tpu_custom_call.1} parent=1 // pred_check_branch
      %450 = sbr.rel (0) target = $region49
    $region48: #{tpu_custom_call.1} parent=1 // pred_region
      %451 = dma.done [#allocation11], 256
    $region49: #{tpu_custom_call.1} parent=1 // pred_fallthru
      _
    %452 = vsyncpa [#allocation4], 1
    %453 = vsyncpa [#allocation7], 1
    %454 = vsyncpa [#allocation5], 1
    %455 = vsyncpa [#allocation11], 1

</llo_original>
